<compile_context>
chip_gen: v7x
topology: tpu7x:2x2x1
jax: 0.10.0
libtpu: 0.0.40
codegen_flags: <defaults>
</compile_context>

<pallas_src>
import jax
import jax.numpy as jnp
from jax import lax
from jax.experimental import pallas as pl
from jax.experimental.pallas import tpu as pltpu

EPS = 0.8         # nn.BatchNorm2d(out_size, 0.8) -> eps = 0.8
NEG_SLOPE = 0.2   # nn.LeakyReLU(0.2)


def _round_up(x, m):
    return ((x + m - 1) // m) * m


# ---------------------------------------------------------------------------
# Pass 1: conv as im2col matmul (bf16 in, f32 acc on the MXU) + per-channel
# sum(y) / sum(y^2) accumulated across M tiles into resident output blocks.
# ---------------------------------------------------------------------------
def _conv_stats_kernel(cols_ref, w_ref, y_ref, sum_ref, sumsq_ref):
    @pl.when(pl.program_id(0) == 0)
    def _init():
        sum_ref[...] = jnp.zeros_like(sum_ref)
        sumsq_ref[...] = jnp.zeros_like(sumsq_ref)

    y = jnp.dot(cols_ref[...], w_ref[...], preferred_element_type=jnp.float32)
    y_ref[...] = y.astype(y_ref.dtype)

    # Zero-padded rows/columns contribute exactly 0 to both accumulators.
    sum_ref[...] += jnp.sum(y, axis=0, keepdims=True)
    sumsq_ref[...] += jnp.sum(y * y, axis=0, keepdims=True)


# ---------------------------------------------------------------------------
# Pass 2: fused BatchNorm affine (one FMA per element) + LeakyReLU(0.2).
# ---------------------------------------------------------------------------
def _bn_lrelu_kernel(y_ref, scale_ref, shift_ref, o_ref):
    z = y_ref[...].astype(jnp.float32) * scale_ref[...] + shift_ref[...]
    o_ref[...] = jnp.where(z > 0, z, NEG_SLOPE * z).astype(o_ref.dtype)


# ---------------------------------------------------------------------------
# Glue
# ---------------------------------------------------------------------------
def _im2col_stride2(x_nhwc):
    """NHWC -> (N*Ho*Wo, 9*Cin) for a 3x3 / stride-2 / pad-1 conv."""
    N, H, W, Cin = x_nhwc.shape
    Ho = (H - 1) // 2 + 1
    Wo = (W - 1) // 2 + 1
    xp = jnp.pad(x_nhwc, ((0, 0), (1, 1), (1, 1), (0, 0)))
    taps = []
    for kh in range(3):
        for kw in range(3):
            p = lax.slice(
                xp,
                (0, kh, kw, 0),
                (N, kh + 2 * (Ho - 1) + 1, kw + 2 * (Wo - 1) + 1, Cin),
                (1, 2, 2, 1))                       # (N, Ho, Wo, Cin)
            taps.append(p.reshape(N * Ho * Wo, Cin))
    return jnp.concatenate(taps, axis=-1), Ho, Wo


def prepare_conv_weight(w_oihw, k_pad, cout_pad, dtype):
    """(Cout, Cin, 3, 3) -> zero-padded (K_pad, Cout_pad) matmul matrix.
    In a real model this is done once at init."""
    Cout, Cin, _, _ = w_oihw.shape
    w_mat = jnp.transpose(w_oihw, (2, 3, 1, 0)).reshape(9 * Cin, Cout)
    return jnp.pad(w_mat,
                   ((0, k_pad - 9 * Cin), (0, cout_pad - Cout))).astype(dtype)


def unet_down(x_nchw, w_oihw, gamma, beta, *, tm=256,
              compute_dtype=jnp.bfloat16):
    """x: (N, Cin, H, W) f32; w: (Cout, Cin, 3, 3); gamma/beta: (Cout,)."""
    N, Cin, H, W = x_nchw.shape
    Cout = w_oihw.shape[0]

    K = 9 * Cin
    k_pad = _round_up(K, 128)        # lane-aligned contraction dim
    cout_pad = _round_up(Cout, 128)  # lane-dense output (unmasked stores)

    # --- one-time parameter prep ---
    w_mat = prepare_conv_weight(w_oihw, k_pad, cout_pad, compute_dtype)
    gamma_p = jnp.pad(gamma.astype(jnp.float32), (0, cout_pad - Cout))
    beta_p = jnp.pad(beta.astype(jnp.float32), (0, cout_pad - Cout))

    # --- glue: NHWC + im2col (TODO(synk): move gather in-kernel) ---
    x_nhwc = jnp.transpose(x_nchw, (0, 2, 3, 1))
    cols, Ho, Wo = _im2col_stride2(x_nhwc)
    M = N * Ho * Wo
    tm = _round_up(min(tm, M), 16)
    m_pad = _round_up(M, tm)
    cols = jnp.pad(cols,
                   ((0, m_pad - M), (0, k_pad - K))).astype(compute_dtype)

    grid = (m_pad // tm,)

    # --- pass 1: conv matmul + BN statistics (M axis carries the stats) ---
    y, ysum, ysumsq = pl.pallas_call(
        _conv_stats_kernel,
        out_shape=(jax.ShapeDtypeStruct((m_pad, cout_pad), compute_dtype),
                   jax.ShapeDtypeStruct((1, cout_pad), jnp.float32),
                   jax.ShapeDtypeStruct((1, cout_pad), jnp.float32)),
        grid=grid,
        in_specs=[
            pl.BlockSpec((tm, k_pad), lambda i: (i, 0)),
            pl.BlockSpec((k_pad, cout_pad), lambda i: (0, 0)),
        ],
        out_specs=(
            pl.BlockSpec((tm, cout_pad), lambda i: (i, 0)),
            pl.BlockSpec((1, cout_pad), lambda i: (0, 0)),  # resident accumulator
            pl.BlockSpec((1, cout_pad), lambda i: (0, 0)),  # resident accumulator
        ),
        compiler_params=pltpu.CompilerParams(
            dimension_semantics=("arbitrary",)),
    )(cols, w_mat)

    # --- finalize BN statistics (tiny (Cout,)-sized op) ---
    mean = ysum[0] / M
    var = jnp.maximum(ysumsq[0] / M - mean * mean, 0.0)   # biased batch variance
    scale = gamma_p * lax.rsqrt(var + EPS)
    shift = beta_p - mean * scale

    # --- pass 2: fused normalize/affine + LeakyReLU (fully parallel tiles) ---
    out = pl.pallas_call(
        _bn_lrelu_kernel,
        out_shape=jax.ShapeDtypeStruct((m_pad, cout_pad), jnp.float32),
        grid=grid,
        in_specs=[
            pl.BlockSpec((tm, cout_pad), lambda i: (i, 0)),
            pl.BlockSpec((1, cout_pad), lambda i: (0, 0)),
            pl.BlockSpec((1, cout_pad), lambda i: (0, 0)),
        ],
        out_specs=pl.BlockSpec((tm, cout_pad), lambda i: (i, 0)),
        compiler_params=pltpu.CompilerParams(
            dimension_semantics=("parallel",)),
    )(y, scale.reshape(1, cout_pad), shift.reshape(1, cout_pad))

    out = out[:M, :Cout].reshape(N, Ho, Wo, Cout)
    return jnp.transpose(out, (0, 3, 1, 2))   # PyTorch-facing NCHW


# ---------------------------------------------------------------------------
# Pure-JAX reference matching the PyTorch forward (train-mode BN, eps=0.8).
# ---------------------------------------------------------------------------
def unet_down_ref(x, w, gamma, beta):
    y = lax.conv_general_dilated(
        x, w, window_strides=(2, 2), padding=((1, 1), (1, 1)),
        dimension_numbers=("NCHW", "OIHW", "NCHW"))
    mean = jnp.mean(y, axis=(0, 2, 3), keepdims=True)
    var = jnp.mean((y - mean) ** 2, axis=(0, 2, 3), keepdims=True)
    y_hat = (y - mean) / jnp.sqrt(var + EPS)
    z = y_hat * gamma.reshape(1, -1, 1, 1) + beta.reshape(1, -1, 1, 1)
    return jnp.where(z > 0, z, NEG_SLOPE * z)


if __name__ == "__main__":
    # Small shapes consistent with a down block (in_size=4, out_size=8).
    N, Cin, H, W, Cout = 2, 4, 16, 16, 8
    key = jax.random.PRNGKey(0)
    kx, kw, kg, kb = jax.random.split(key, 4)
    x = jax.random.normal(kx, (N, Cin, H, W), dtype=jnp.float32)
    conv_w = jax.random.normal(kw, (Cout, Cin, 3, 3), dtype=jnp.float32) * 0.1
    gamma = 1.0 + 0.1 * jax.random.normal(kg, (Cout,), dtype=jnp.float32)
    beta = 0.1 * jax.random.normal(kb, (Cout,), dtype=jnp.float32)

    # tm=64 -> a multi-step grid at this toy shape, exercising the tiled
    # stat-accumulation path; the default tm=256 targets production shapes.
    out = jax.block_until_ready(unet_down(x, conv_w, gamma, beta, tm=64))
    ref = jax.block_until_ready(unet_down_ref(x, conv_w, gamma, beta))

    assert out.shape == (N, Cout, H // 2, W // 2), out.shape
    # bf16 MXU inputs (f32 accumulation) vs. the pure-f32 reference.
    assert jnp.allclose(out, ref, atol=5e-2, rtol=5e-2), float(
        jnp.max(jnp.abs(out - ref)))
    print("KERNEL_OK")
</pallas_src>

<mosaic_0001>
module attributes {stable_mosaic.version = 11 : i64} {
  func.func @_conv_stats_kernel(%arg0: i32, %arg1: memref<64x128xbf16, #tpu.memory_space<vmem>>, %arg2: memref<128x128xbf16, #tpu.memory_space<vmem>>, %arg3: memref<64x128xbf16, #tpu.memory_space<vmem>>, %arg4: memref<1x128xf32, #tpu.memory_space<vmem>>, %arg5: memref<1x128xf32, #tpu.memory_space<vmem>>) attributes {dimension_semantics = [#tpu.dimension_semantics<arbitrary>], iteration_bounds = array<i64: 2>, scalar_prefetch = 0 : i64, scratch_operands = 0 : i64, tpu.core_type = #tpu.core_type<tc>, window_params = [{transform_indices = @transform_0, window_bounds = array<i64: 64, 128>}, {pipeline_mode = #tpu.pipeline_mode<synchronous>, transform_indices = @transform_1, window_bounds = array<i64: 128, 128>}, {transform_indices = @transform_2, window_bounds = array<i64: 64, 128>}, {pipeline_mode = #tpu.pipeline_mode<synchronous>, transform_indices = @transform_3, window_bounds = array<i64: 1, 128>}, {pipeline_mode = #tpu.pipeline_mode<synchronous>, transform_indices = @transform_4, window_bounds = array<i64: 1, 128>}]} {
    %c0_i32 = arith.constant 0 : i32
    %0 = arith.cmpi eq, %arg0, %c0_i32 : i32
    %1 = arith.extui %0 : i1 to i32
    %c0_i32_0 = arith.constant 0 : i32
    %2 = arith.cmpi ne, %1, %c0_i32_0 : i32
    scf.if %2 {
      %cst_16 = arith.constant 0.000000e+00 : f32
      %19 = vector.broadcast %cst_16 : f32 to vector<1x128xf32>
      %c0_17 = arith.constant 0 : index
      %c0_18 = arith.constant 0 : index
      %20 = vector.load %arg4[%c0_17, %c0_18] : memref<1x128xf32, #tpu.memory_space<vmem>>, vector<1x128xf32>
      tpu.vector_store %arg4[%c0_17, %c0_18], %19 {strides = array<i32>} : memref<1x128xf32, #tpu.memory_space<vmem>>, vector<1x128xf32>,
      %cst_19 = arith.constant 0.000000e+00 : f32
      %21 = vector.broadcast %cst_19 : f32 to vector<1x128xf32>
      %c0_20 = arith.constant 0 : index
      %c0_21 = arith.constant 0 : index
      %22 = vector.load %arg5[%c0_20, %c0_21] : memref<1x128xf32, #tpu.memory_space<vmem>>, vector<1x128xf32>
      tpu.vector_store %arg5[%c0_20, %c0_21], %21 {strides = array<i32>} : memref<1x128xf32, #tpu.memory_space<vmem>>, vector<1x128xf32>,
    } else {
    }
    %c0 = arith.constant 0 : index
    %c0_1 = arith.constant 0 : index
    %3 = vector.load %arg1[%c0, %c0_1] : memref<64x128xbf16, #tpu.memory_space<vmem>>, vector<64x128xbf16>
    %c0_2 = arith.constant 0 : index
    %c0_3 = arith.constant 0 : index
    %4 = vector.load %arg2[%c0_2, %c0_3] : memref<128x128xbf16, #tpu.memory_space<vmem>>, vector<128x128xbf16>
    %cst = arith.constant dense<0.000000e+00> : vector<64x128xf32>
    %5 = tpu.matmul %3, %4, %cst {dimension_numbers = #tpu.dot_dimension_numbers<[1], [0], [0], [1], [0, 0, 1, 1], [], []>} : vector<64x128xbf16>, vector<128x128xbf16>, vector<64x128xf32> -> vector<64x128xf32>
    %6 = arith.truncf %5 : vector<64x128xf32> to vector<64x128xbf16>
    %c0_4 = arith.constant 0 : index
    %c0_5 = arith.constant 0 : index
    %7 = vector.load %arg3[%c0_4, %c0_5] : memref<64x128xbf16, #tpu.memory_space<vmem>>, vector<64x128xbf16>
    tpu.vector_store %arg3[%c0_4, %c0_5], %6 {strides = array<i32>} : memref<64x128xbf16, #tpu.memory_space<vmem>>, vector<64x128xbf16>,
    %c0_6 = arith.constant 0 : index
    %c0_7 = arith.constant 0 : index
    %8 = vector.load %arg4[%c0_6, %c0_7] : memref<1x128xf32, #tpu.memory_space<vmem>>, vector<1x128xf32>
    %cst_8 = arith.constant dense<0.000000e+00> : vector<128xf32>
    %9 = vector.multi_reduction <add>, %5, %cst_8 [0] : vector<64x128xf32> to vector<128xf32>
    %10 = vector.shape_cast %9 : vector<128xf32> to vector<1x128xf32>
    %11 = arith.addf %8, %10 : vector<1x128xf32>
    %c0_9 = arith.constant 0 : index
    %c0_10 = arith.constant 0 : index
    %12 = vector.load %arg4[%c0_9, %c0_10] : memref<1x128xf32, #tpu.memory_space<vmem>>, vector<1x128xf32>
    tpu.vector_store %arg4[%c0_9, %c0_10], %11 {strides = array<i32>} : memref<1x128xf32, #tpu.memory_space<vmem>>, vector<1x128xf32>,
    %c0_11 = arith.constant 0 : index
    %c0_12 = arith.constant 0 : index
    %13 = vector.load %arg5[%c0_11, %c0_12] : memref<1x128xf32, #tpu.memory_space<vmem>>, vector<1x128xf32>
    %14 = arith.mulf %5, %5 : vector<64x128xf32>
    %cst_13 = arith.constant dense<0.000000e+00> : vector<128xf32>
    %15 = vector.multi_reduction <add>, %14, %cst_13 [0] : vector<64x128xf32> to vector<128xf32>
    %16 = vector.shape_cast %15 : vector<128xf32> to vector<1x128xf32>
    %17 = arith.addf %13, %16 : vector<1x128xf32>
    %c0_14 = arith.constant 0 : index
    %c0_15 = arith.constant 0 : index
    %18 = vector.load %arg5[%c0_14, %c0_15] : memref<1x128xf32, #tpu.memory_space<vmem>>, vector<1x128xf32>
    tpu.vector_store %arg5[%c0_14, %c0_15], %17 {strides = array<i32>} : memref<1x128xf32, #tpu.memory_space<vmem>>, vector<1x128xf32>,
    return
  }
  func.func @transform_0(%arg0: i32) -> (i32, i32) {
    %c0_i32 = arith.constant 0 : i32
    %c0_i32_0 = arith.constant 0 : i32
    return %arg0, %c0_i32 : i32, i32
  }
  func.func @transform_1(%arg0: i32) -> (i32, i32) {
    %c0_i32 = arith.constant 0 : i32
    %c0_i32_0 = arith.constant 0 : i32
    %c0_i32_1 = arith.constant 0 : i32
    return %c0_i32, %c0_i32_0 : i32, i32
  }
  func.func @transform_2(%arg0: i32) -> (i32, i32) {
    %c0_i32 = arith.constant 0 : i32
    %c0_i32_0 = arith.constant 0 : i32
    return %arg0, %c0_i32 : i32, i32
  }
  func.func @transform_3(%arg0: i32) -> (i32, i32) {
    %c0_i32 = arith.constant 0 : i32
    %c0_i32_0 = arith.constant 0 : i32
    %c0_i32_1 = arith.constant 0 : i32
    return %c0_i32, %c0_i32_0 : i32, i32
  }
  func.func @transform_4(%arg0: i32) -> (i32, i32) {
    %c0_i32 = arith.constant 0 : i32
    %c0_i32_0 = arith.constant 0 : i32
    %c0_i32_1 = arith.constant 0 : i32
    return %c0_i32, %c0_i32_0 : i32, i32
  }
}

</mosaic_0001>

<llo_original>
// kernel: tpu_custom_call.1
$region0: #{tpu_custom_call.1}
  #allocation0 [shape = 'u32[]', space=smem, size = 0x4, offset = 0x4, fixed_abs, tag = 'smem constant byte address 0x4 - core index']
  #allocation1 [shape = 'u32[144,128]{1,0:T(1,128)}', space=vmem, size = 0x12000, scoped, tag = 'internal scratch']
  %s0 = inlined_call_operand.hbm [shape: bf16[128,128], index: 0, kind: input, shape index: {}]
  %s1 = inlined_call_operand.hbm [shape: bf16[128,128], index: 1, kind: input, shape index: {}]
  %s2 = inlined_call_operand.hbm [shape: bf16[128,128], index: 2, kind: output, shape index: {0}]
  %s3 = inlined_call_operand.hbm [shape: f32[1,128], index: 3, kind: output, shape index: {1}]
  %s4 = inlined_call_operand.hbm [shape: f32[1,128], index: 4, kind: output, shape index: {2}]
  %5 = xla_tuple %s2, %s3, %s4
  %s6 = sld [smem:[#allocation0]]
  $region69: #{tpu_custom_call.1} parent=0
    _
  %s8 = ssub.s32 1, %s6
  %s9 = scalar_select 0, %s8, %s6
  $region1: #{tpu_custom_call.1} parent=0
    #allocation2 [shape = 'u8[32768]{0}', space=vmem, size = 0x8000, scoped, tag = 'input window, operand 0']
    #allocation3 [shape = 's32[2]{0}', space=sflag, size = 0x8, scoped, tag = 'scoped memory for tpu_custom_call.1']
    #allocation4 [shape = 's32[2]{0}', space=sflag, size = 0x8, scoped, tag = 'scoped memory for tpu_custom_call.1']
    #allocation5 [shape = 'u8[32768]{0}', space=vmem, size = 0x8000, scoped, tag = 'input window, operand 1, single buffered']
    #allocation6 [shape = 's32[1]{0}', space=sflag, size = 0x4, scoped, tag = 'scoped memory for tpu_custom_call.1']
    #allocation7 [shape = 'u8[32768]{0}', space=vmem, size = 0x8000, scoped, tag = 'output window, operand 0']
    #allocation8 [shape = 'u8[512]{0}', space=vmem, size = 0x400, scoped, tag = 'output window, operand 1, single buffered']
    #allocation9 [shape = 's32[1]{0}', space=sflag, size = 0x4, scoped, tag = 'scoped memory for tpu_custom_call.1']
    #allocation10 [shape = 'u8[512]{0}', space=vmem, size = 0x400, scoped, tag = 'output window, operand 2, single buffered']
    %10 = vsyncpa [#allocation3], 0
    %s11 = scalar_lea.sflag [#allocation3], 1
    %12 = vsyncpa %s11, 0
    %13 = vsyncpa [#allocation6], 0
    %14 = vsyncpa [#allocation4], 0
    %s15 = scalar_lea.sflag [#allocation4], 1
    %16 = vsyncpa %s15, 0
    %17 = vsyncpa [#allocation9], 0
    loop: start=0, step=1, limit=4
    $region2: #{tpu_custom_call.1} parent=1 // loop_pre_header
      _
    $region3: #{tpu_custom_call.1} parent=1 // loop_header
      %s19 = sphi 0, %s23
      %p20 = scmp.ge.s32.totalorder %s19, 4
      %s29 = sphi 0, %s31
      %s32 = sphi 0, %s29
      %s33 = sphi 0, %s32
      %s49 = sphi 0, %s33
      %s53 = sphi 0, %s53
      %s55 = sphi 0, %s53
      %s56 = sphi 0, %s55
      %s70 = sphi 0, %s56
      %s76 = sphi 0, %s78
      %s79 = sphi 0, %s76
      %s80 = sphi 0, %s79
      %s96 = sphi 0, %s80
      %s100 = sphi 0, %s100
      %s102 = sphi 0, %s100
      %s103 = sphi 0, %s102
      %s117 = sphi 0, %s103
      %s121 = sphi 0, %s121
      %s123 = sphi 0, %s121
      %s124 = sphi 0, %s123
      %s138 = sphi 0, %s124
    $region4: #{tpu_custom_call.1} parent=1 // loop_header_branch
      %22 = sbr.rel (%p20) target = $region8
    $region5: #{tpu_custom_call.1} parent=1 // loop_body
      %s24 = ssub.s32 %s19, 1
      %s25 = ssub.s32 %s19, 2
      %s26 = sadd.s32 %s19, 1
      %s27 = ssub.s32 %s19, %s26
      %p28 = scmp.eq.s32.totalorder %s27, 0
      %s30 = sadd.s32 %s29, 1
      %s31 = scalar_select %p28, %s29, %s30
      %p34 = pneg %p28
      %p35 = scmp.eq.s32.totalorder %s19, 1
      %p36 = por %p34, %p35
      %p37 = scmp.ne.s32.totalorder %s29, %s32
      %p38 = scmp.eq.s32.totalorder %s19, 0
      %p39 = por %p37, %p38
      %p40 = scmp.ne.s32.totalorder %s29, %s32
      %p41 = scmp.eq.s32.totalorder %s24, 1
      %p42 = por %p40, %p41
      %p43 = scmp.ne.s32.totalorder %s32, %s33
      %p44 = scmp.eq.s32.totalorder %s24, 0
      %p45 = por %p43, %p44
      %p46 = scmp.ne.s32.totalorder %s32, %s33
      %p47 = scmp.eq.s32.totalorder %s25, 1
      %p48 = por %p46, %p47
      %p50 = scmp.ne.s32.totalorder %s33, %s49
      %p51 = scmp.eq.s32.totalorder %s25, 0
      %p52 = por %p50, %p51
      %s54 = sadd.s32 %s53, 1
      %p57 = scmp.eq.s32.totalorder %s19, 1
      %p58 = scmp.ne.s32.totalorder %s53, %s55
      %p59 = scmp.eq.s32.totalorder %s19, 0
      %p60 = por %p58, %p59
      %p61 = scmp.ne.s32.totalorder %s53, %s55
      %p62 = scmp.eq.s32.totalorder %s24, 1
      %p63 = por %p61, %p62
      %p64 = scmp.ne.s32.totalorder %s55, %s56
      %p65 = scmp.eq.s32.totalorder %s24, 0
      %p66 = por %p64, %p65
      %p67 = scmp.ne.s32.totalorder %s55, %s56
      %p68 = scmp.eq.s32.totalorder %s25, 1
      %p69 = por %p67, %p68
      %p71 = scmp.ne.s32.totalorder %s56, %s70
      %p72 = scmp.eq.s32.totalorder %s25, 0
      %p73 = por %p71, %p72
      %s74 = ssub.s32 %s19, %s26
      %p75 = scmp.eq.s32.totalorder %s74, 0
      %s77 = sadd.s32 %s76, 1
      %s78 = scalar_select %p75, %s76, %s77
      %p81 = pneg %p75
      %p82 = scmp.eq.s32.totalorder %s19, 1
      %p83 = por %p81, %p82
      %p84 = scmp.ne.s32.totalorder %s76, %s79
      %p85 = scmp.eq.s32.totalorder %s19, 0
      %p86 = por %p84, %p85
      %p87 = scmp.ne.s32.totalorder %s76, %s79
      %p88 = scmp.eq.s32.totalorder %s24, 1
      %p89 = por %p87, %p88
      %p90 = scmp.ne.s32.totalorder %s79, %s80
      %p91 = scmp.eq.s32.totalorder %s24, 0
      %p92 = por %p90, %p91
      %p93 = scmp.ne.s32.totalorder %s79, %s80
      %p94 = scmp.eq.s32.totalorder %s25, 1
      %p95 = por %p93, %p94
      %p97 = scmp.ne.s32.totalorder %s80, %s96
      %p98 = scmp.eq.s32.totalorder %s25, 0
      %p99 = por %p97, %p98
      %s101 = sadd.s32 %s100, 1
      %p104 = scmp.eq.s32.totalorder %s19, 1
      %p105 = scmp.ne.s32.totalorder %s100, %s102
      %p106 = scmp.eq.s32.totalorder %s19, 0
      %p107 = por %p105, %p106
      %p108 = scmp.ne.s32.totalorder %s100, %s102
      %p109 = scmp.eq.s32.totalorder %s24, 1
      %p110 = por %p108, %p109
      %p111 = scmp.ne.s32.totalorder %s102, %s103
      %p112 = scmp.eq.s32.totalorder %s24, 0
      %p113 = por %p111, %p112
      %p114 = scmp.ne.s32.totalorder %s102, %s103
      %p115 = scmp.eq.s32.totalorder %s25, 1
      %p116 = por %p114, %p115
      %p118 = scmp.ne.s32.totalorder %s103, %s117
      %p119 = scmp.eq.s32.totalorder %s25, 0
      %p120 = por %p118, %p119
      %s122 = sadd.s32 %s121, 1
      %p125 = scmp.eq.s32.totalorder %s19, 1
      %p126 = scmp.ne.s32.totalorder %s121, %s123
      %p127 = scmp.eq.s32.totalorder %s19, 0
      %p128 = por %p126, %p127
      %p129 = scmp.ne.s32.totalorder %s121, %s123
      %p130 = scmp.eq.s32.totalorder %s24, 1
      %p131 = por %p129, %p130
      %p132 = scmp.ne.s32.totalorder %s123, %s124
      %p133 = scmp.eq.s32.totalorder %s24, 0
      %p134 = por %p132, %p133
      %p135 = scmp.ne.s32.totalorder %s123, %s124
      %p136 = scmp.eq.s32.totalorder %s25, 1
      %p137 = por %p135, %p136
      %p139 = scmp.ne.s32.totalorder %s124, %s138
      %p140 = scmp.eq.s32.totalorder %s25, 0
      %p141 = por %p139, %p140
      %p142 = scmp.le.s32.totalorder 1, %s19
      %p143 = scmp.lt.s32.totalorder %s19, 3
      %p144 = pnand %p142, %p143
      %p145 = pneg %p144
      // Predicated region
      $region9: #{tpu_custom_call.1} parent=5 // pred_check
        _
      $region10: #{tpu_custom_call.1} parent=5 // pred_check_branch
        %147 = sbr.rel (%p144) target = $region12
      $region11: #{tpu_custom_call.1} parent=5 // pred_region
        %s148 = ssub.s32 %s19, 1
        // Predicated region
        $region13: #{tpu_custom_call.1} parent=11 // pred_check
          %p149 = pneg %p66
        $region14: #{tpu_custom_call.1} parent=11 // pred_check_branch
          %151 = sbr.rel (%p149) target = $region16
        $region15: #{tpu_custom_call.1} parent=11 // pred_region
          %s153 = ssub.s32 1024, 1024
          %154 = vsyncadd [#allocation6], %s153
          %s155 = sshll.u32 [#allocation5], 4
          %s156 = int_to_ptr.vmem [resolvable:$true] %s155
          %161 = dma.hbm_to_vmem [thread:$0]  %s1, 1024, %s156, [#allocation6], 64, 64, 4
        $region16: #{tpu_custom_call.1} parent=11 // pred_fallthru
          _
      $region12: #{tpu_custom_call.1} parent=5 // pred_fallthru
        _
      %p162 = scmp.lt.s32.totalorder %s19, 2
      // Predicated region
      $region17: #{tpu_custom_call.1} parent=5 // pred_check
        %p163 = pneg %p162
      $region18: #{tpu_custom_call.1} parent=5 // pred_check_branch
        %165 = sbr.rel (%p163) target = $region20
      $region19: #{tpu_custom_call.1} parent=5 // pred_region
        // Predicated region
        $region21: #{tpu_custom_call.1} parent=19 // pred_check
          %p166 = pneg %p39
        $region22: #{tpu_custom_call.1} parent=19 // pred_check_branch
          %168 = sbr.rel (%p166) target = $region24
        $region23: #{tpu_custom_call.1} parent=19 // pred_region
          %s169 = sand.u32 %s29, 1
          %s170 = scalar_lea.sflag [#allocation3], %s169
          %s171 = sand.u32 %s29, 1
          %s172 = smul.addr %s171, 32
          %s173 = scalar_lea.vmem [#allocation2], %s172
          %s174 = smul.u32 8, %s19
          %s176 = ssub.s32 512, 512
          %177 = vsyncadd %s170, %s176
          %s178 = smul.addr %s174, 64
          %s179 = scalar_lea.hbm %s0, %s178
          %s180 = sshll.u32 %s173, 4
          %s181 = int_to_ptr.vmem [resolvable:$true] %s180
          %186 = dma.hbm_to_vmem [thread:$0]  %s179, 512, %s181, %s170, 64, 64, 4
        $region24: #{tpu_custom_call.1} parent=19 // pred_fallthru
          _
      $region20: #{tpu_custom_call.1} parent=5 // pred_fallthru
        _
      %p187 = scmp.le.s32.totalorder 1, %s19
      %p188 = scmp.lt.s32.totalorder %s19, 3
      %p189 = pnand %p187, %p188
      %p190 = pneg %p189
      // Predicated region
      $region25: #{tpu_custom_call.1} parent=5 // pred_check
        _
      $region26: #{tpu_custom_call.1} parent=5 // pred_check_branch
        %192 = sbr.rel (%p189) target = $region28
      $region27: #{tpu_custom_call.1} parent=5 // pred_region
        %s193 = ssub.s32 %s19, 1
        %s194 = sand.u32 %s32, 1
        %s195 = scalar_lea.sflag [#allocation3], %s194
        %s196 = sand.u32 %s32, 1
        %s197 = smul.addr %s196, 32
        %s198 = scalar_lea.vmem [#allocation2], %s197
        // Predicated region
        $region29: #{tpu_custom_call.1} parent=27 // pred_check
          %p199 = pneg %p45
        $region30: #{tpu_custom_call.1} parent=27 // pred_check_branch
          %201 = sbr.rel (%p199) target = $region32
        $region31: #{tpu_custom_call.1} parent=27 // pred_region
          %202 = dma.done %s195, 512
        $region32: #{tpu_custom_call.1} parent=27 // pred_fallthru
          _
        // Predicated region
        $region33: #{tpu_custom_call.1} parent=27 // pred_check
          %p203 = pneg %p66
        $region34: #{tpu_custom_call.1} parent=27 // pred_check_branch
          %205 = sbr.rel (%p203) target = $region36
        $region35: #{tpu_custom_call.1} parent=27 // pred_region
          %206 = dma.done [#allocation6], 1024
        $region36: #{tpu_custom_call.1} parent=27 // pred_fallthru
          _
        %s207 = sand.u32 %s32, 1
        %s208 = scalar_lea.sflag [#allocation3], %s207
        %s209 = sand.u32 %s32, 1
        %s210 = smul.addr %s209, 32
        %s211 = scalar_lea.vmem [#allocation2], %s210
        %p212 = pneg %p45
        %p213 = pneg %p42
        %p214 = pneg %p66
        %p215 = pneg %p63
        %p216 = pneg %p92
        %p217 = pneg %p89
        %s218 = sand.u32 %s79, 1
        %s219 = scalar_lea.sflag [#allocation4], %s218
        %s220 = sand.u32 %s79, 1
        %s221 = smul.addr %s220, 32
        %s222 = scalar_lea.vmem [#allocation7], %s221
        %p223 = pneg %p113
        %p224 = pneg %p110
        %p225 = pneg %p134
        %p226 = pneg %p131
        %s227 = smul.u32 8, %s24
        %s228 = smul.u32 8, %s24
        %p230 = scmp.eq.s32.totalorder %s24, 0
        // Predicated region
        $region37: #{tpu_custom_call.1} parent=27 // pred_check
          %p231 = pneg %p230
        $region38: #{tpu_custom_call.1} parent=27 // pred_check_branch
          %233 = sbr.rel (%p231) target = $region40
        $region39: #{tpu_custom_call.1} parent=27 // pred_region
          %234 = vst [vmem:[#allocation8] sm:$0x1] 0.0
          %235 = vst [vmem:[#allocation10] sm:$0x1] 0.0
        $region40: #{tpu_custom_call.1} parent=27 // pred_fallthru
          _
        %v236 = vld [vmem:[%s198] sm:$0xf]
        %v237 = vld [vmem:[%s198 + $0x4] sm:$0xf]
        %v238 = vld [vmem:[%s198 + $0x8] sm:$0xf]
        %v239 = vld [vmem:[%s198 + $0xc] sm:$0xf]
        %v240 = vld [vmem:[%s198 + $0x10] sm:$0xf]
        %v241 = vld [vmem:[%s198 + $0x14] sm:$0xf]
        %v242 = vld [vmem:[%s198 + $0x18] sm:$0xf]
        %v243 = vld [vmem:[%s198 + $0x1c] sm:$0xf]
        %v244 = vld [vmem:[#allocation5] sm:$0xf]
        %v245 = vld [vmem:[#allocation5 + $0x4] sm:$0xf]
        %v246 = vld [vmem:[#allocation5 + $0x8] sm:$0xf]
        %v247 = vld [vmem:[#allocation5 + $0xc] sm:$0xf]
        %v248 = vld [vmem:[#allocation5 + $0x10] sm:$0xf]
        %v249 = vld [vmem:[#allocation5 + $0x14] sm:$0xf]
        %v250 = vld [vmem:[#allocation5 + $0x18] sm:$0xf]
        %v251 = vld [vmem:[#allocation5 + $0x1c] sm:$0xf]
        %v252 = vld [vmem:[#allocation5 + $0x20] sm:$0xf]
        %v253 = vld [vmem:[#allocation5 + $0x24] sm:$0xf]
        %v254 = vld [vmem:[#allocation5 + $0x28] sm:$0xf]
        %v255 = vld [vmem:[#allocation5 + $0x2c] sm:$0xf]
        %v256 = vld [vmem:[#allocation5 + $0x30] sm:$0xf]
        %v257 = vld [vmem:[#allocation5 + $0x34] sm:$0xf]
        %v258 = vld [vmem:[#allocation5 + $0x38] sm:$0xf]
        %v259 = vld [vmem:[#allocation5 + $0x3c] sm:$0xf]
        %v268 = vunpack.c.l.b16 %v236
        %v269 = vunpack.c.l.b16 %v237
        %v270 = vunpack.c.l.b16 %v238
        %v271 = vunpack.c.l.b16 %v239
        %v272 = vunpack.c.l.b16 %v240
        %v273 = vunpack.c.l.b16 %v241
        %v274 = vunpack.c.l.b16 %v242
        %v275 = vunpack.c.l.b16 %v243
        %v276 = vpack.c.b16 %v269, %v268
        %v277 = vpack.c.b16 %v271, %v270
        %v278 = vpack.c.b16 %v273, %v272
        %v279 = vpack.c.b16 %v275, %v274
        %v300 = vunpack.c.l.b16 %v244
        %v301 = vunpack.c.l.b16 %v245
        %v302 = vunpack.c.l.b16 %v246
        %v303 = vunpack.c.l.b16 %v247
        %v304 = vunpack.c.l.b16 %v248
        %v305 = vunpack.c.l.b16 %v249
        %v306 = vunpack.c.l.b16 %v250
        %v307 = vunpack.c.l.b16 %v251
        %v308 = vunpack.c.l.b16 %v252
        %v309 = vunpack.c.l.b16 %v253
        %v310 = vunpack.c.l.b16 %v254
        %v311 = vunpack.c.l.b16 %v255
        %v312 = vunpack.c.l.b16 %v256
        %v313 = vunpack.c.l.b16 %v257
        %v314 = vunpack.c.l.b16 %v258
        %v315 = vunpack.c.l.b16 %v259
        %v316 = vpack.c.b16 %v301, %v300
        %v317 = vpack.c.b16 %v303, %v302
        %v318 = vpack.c.b16 %v305, %v304
        %v319 = vpack.c.b16 %v307, %v306
        %v320 = vpack.c.b16 %v309, %v308
        %v321 = vpack.c.b16 %v311, %v310
        %v322 = vpack.c.b16 %v313, %v312
        %v323 = vpack.c.b16 %v315, %v314
        %332 = vmatprep.subr.bf16.mxu0 0
        %333 = vmatpush1.bf16.msra.mxu0 %v316
        %334 = vmatprep.subr.bf16.mxu0 0
        %335 = vmatpush1.bf16.msra.mxu0 %v317
        %336 = vmatprep.subr.bf16.mxu0 0
        %337 = vmatpush1.bf16.msra.mxu0 %v318
        %338 = vmatprep.subr.bf16.mxu0 0
        %339 = vmatpush1.bf16.msra.mxu0 %v319
        %340 = vmatprep.subr.bf16.mxu0 0
        %341 = vmatpush1.bf16.msra.mxu0 %v320
        %342 = vmatprep.subr.bf16.mxu0 0
        %343 = vmatpush1.bf16.msra.mxu0 %v321
        %344 = vmatprep.subr.bf16.mxu0 0
        %345 = vmatpush1.bf16.msra.mxu0 %v322
        %346 = vmatprep.subr.bf16.mxu0 0
        %347 = vmatpush1.bf16.msra.mxu0 %v323
        %348 = vmatprep.subr.bf16.mxu0 0
        %349 = vmatpush1.bf16.msra.mxu0 0
        %350 = vmatprep.subr.bf16.mxu0 0
        %351 = vmatpush1.bf16.msra.mxu0 0
        %352 = vmatprep.subr.bf16.mxu0 0
        %353 = vmatpush1.bf16.msra.mxu0 0
        %354 = vmatprep.subr.bf16.mxu0 0
        %355 = vmatpush1.bf16.msra.mxu0 0
        %356 = vmatprep.subr.bf16.mxu0 0
        %357 = vmatpush1.bf16.msra.mxu0 0
        %358 = vmatprep.subr.bf16.mxu0 0
        %359 = vmatpush1.bf16.msra.mxu0 0
        %360 = vmatprep.subr.bf16.mxu0 0
        %361 = vmatpush1.bf16.msra.mxu0 0
        %362 = vmatprep.subr.bf16.mxu0 0
        %363 = vmatpush1.bf16.msra.mxu0 0
        %364 = vmatprep.mubr.bf16.mxu0 0
        %365 = vmatmul.mubr.bf16.gmra.mrb[0].mxu0 %v276
        %v366 = vpop.f32.mrb[0].mxu0
        %v367 = vadd.f32 0.0, %v366
        %v368 = vpop.f32.mrb[0].mxu0
        %v369 = vpop.f32.mrb[0].mxu0
        %v370 = vadd.f32 0.0, %v369
        %v371 = vpop.f32.mrb[0].mxu0
        %372 = vmatprep.mubr.bf16.mxu0 0
        %373 = vmatmul.mubr.bf16.gmra.mrb[0].mxu0 %v277
        %v374 = vpop.f32.mrb[0].mxu0
        %v375 = vadd.f32 0.0, %v374
        %v376 = vpop.f32.mrb[0].mxu0
        %v377 = vpop.f32.mrb[0].mxu0
        %v378 = vadd.f32 0.0, %v377
        %v379 = vpop.f32.mrb[0].mxu0
        %380 = vmatprep.mubr.bf16.mxu0 0
        %381 = vmatmul.mubr.bf16.gmra.mrb[0].mxu0 %v278
        %v382 = vpop.f32.mrb[0].mxu0
        %v383 = vadd.f32 0.0, %v382
        %v384 = vpop.f32.mrb[0].mxu0
        %v385 = vpop.f32.mrb[0].mxu0
        %v386 = vadd.f32 0.0, %v385
        %v387 = vpop.f32.mrb[0].mxu0
        %388 = vmatprep.mubr.bf16.mxu0 0
        %389 = vmatmul.mubr.bf16.gmra.mrb[0].mxu0 %v279
        %v390 = vpop.f32.mrb[0].mxu0
        %v391 = vadd.f32 0.0, %v390
        %v392 = vpop.f32.mrb[0].mxu0
        %v393 = vpop.f32.mrb[0].mxu0
        %v394 = vadd.f32 0.0, %v393
        %v395 = vpop.f32.mrb[0].mxu0
        %396 = vdwg.mxu0
        %v397 = vpack.c.bf16 %v370, %v367
        %v398 = vpack.c.bf16 %v378, %v375
        %v399 = vpack.c.bf16 %v386, %v383
        %v400 = vpack.c.bf16 %v394, %v391
        %v405 = vunpack.c.l.b16 %v397
        %v406 = vunpack.c.h.b16 %v397
        %v407 = vunpack.c.l.b16 %v398
        %v408 = vunpack.c.h.b16 %v398
        %v409 = vunpack.c.l.b16 %v399
        %v410 = vunpack.c.h.b16 %v399
        %v411 = vunpack.c.l.b16 %v400
        %v412 = vunpack.c.h.b16 %v400
        %v413 = vpack.c.b16 %v405, %v405
        %v414 = vpack.c.b16 %v406, %v406
        %v415 = vpack.c.b16 %v407, %v407
        %v416 = vpack.c.b16 %v408, %v408
        %v417 = vpack.c.b16 %v409, %v409
        %v418 = vpack.c.b16 %v410, %v410
        %v419 = vpack.c.b16 %v411, %v411
        %v420 = vpack.c.b16 %v412, %v412
        %429 = vst [vmem:[%s222] sm:$0xf] %v413
        %430 = vst [vmem:[%s222 + $0x4] sm:$0xf] %v414
        %431 = vst [vmem:[%s222 + $0x8] sm:$0xf] %v415
        %432 = vst [vmem:[%s222 + $0xc] sm:$0xf] %v416
        %433 = vst [vmem:[%s222 + $0x10] sm:$0xf] %v417
        %434 = vst [vmem:[%s222 + $0x14] sm:$0xf] %v418
        %435 = vst [vmem:[%s222 + $0x18] sm:$0xf] %v419
        %436 = vst [vmem:[%s222 + $0x1c] sm:$0xf] %v420
        %v437 = vld [vmem:[#allocation8] sm:$0x1]
        %v438 = vadd.f32 %v367, %v370
        %v439 = vadd.f32 %v438, %v375
        %v440 = vadd.f32 %v439, %v378
        %v441 = vadd.f32 %v440, %v383
        %v442 = vadd.f32 %v441, %v386
        %v443 = vadd.f32 %v442, %v391
        %v444 = vadd.f32 %v443, %v394
        %v445 = vrot.slane %v444, 4
        %v446 = vadd.f32 %v444, %v445
        %v447 = vrot.slane %v446, 2
        %v448 = vadd.f32 %v446, %v447
        %v449 = vrot.slane %v448, 1
        %v450 = vadd.f32 %v448, %v449
        %v451 = vadd.f32 %v437, %v450
        %452 = vst [vmem:[#allocation8] sm:$0x1] %v451
        %v453 = vld [vmem:[#allocation10] sm:$0x1]
        %v454 = vmul.f32 %v367, %v367
        %v455 = vmul.f32 %v370, %v370
        %v456 = vmul.f32 %v375, %v375
        %v457 = vmul.f32 %v378, %v378
        %v458 = vmul.f32 %v383, %v383
        %v459 = vmul.f32 %v386, %v386
        %v460 = vmul.f32 %v391, %v391
        %v461 = vmul.f32 %v394, %v394
        %v462 = vadd.f32 %v454, %v455
        %v463 = vadd.f32 %v462, %v456
        %v464 = vadd.f32 %v463, %v457
        %v465 = vadd.f32 %v464, %v458
        %v466 = vadd.f32 %v465, %v459
        %v467 = vadd.f32 %v466, %v460
        %v468 = vadd.f32 %v467, %v461
        %v469 = vrot.slane %v468, 4
        %v470 = vadd.f32 %v468, %v469
        %v471 = vrot.slane %v470, 2
        %v472 = vadd.f32 %v470, %v471
        %v473 = vrot.slane %v472, 1
        %v474 = vadd.f32 %v472, %v473
        %v475 = vadd.f32 %v453, %v474
        %476 = vst [vmem:[#allocation10] sm:$0x1] %v475
        %s477 = sand.u32 %s79, 1
        %s478 = scalar_lea.sflag [#allocation4], %s477
        %s479 = sand.u32 %s79, 1
        %s480 = smul.addr %s479, 32
        %s481 = scalar_lea.vmem [#allocation7], %s480
        // Predicated region
        $region41: #{tpu_custom_call.1} parent=27 // pred_check
          %p482 = pneg %p89
        $region42: #{tpu_custom_call.1} parent=27 // pred_check_branch
          %484 = sbr.rel (%p482) target = $region44
        $region43: #{tpu_custom_call.1} parent=27 // pred_region
          %s485 = smul.u32 8, %s24
          %s487 = ssub.s32 512, 512
          %488 = vsyncadd %s478, %s487
          %s489 = smul.addr %s485, 64
          %s490 = scalar_lea.hbm %s2, %s489
          %s491 = sshll.u32 %s481, 4
          %s492 = int_to_ptr.vmem [resolvable:$true] %s491
          %497 = dma.vmem_to_hbm [thread:$0]  %s492, 512, %s490, %s478, 64, 64, 4
        $region44: #{tpu_custom_call.1} parent=27 // pred_fallthru
          _
        // Predicated region
        $region45: #{tpu_custom_call.1} parent=27 // pred_check
          %p498 = pneg %p110
        $region46: #{tpu_custom_call.1} parent=27 // pred_check_branch
          %500 = sbr.rel (%p498) target = $region48
        $region47: #{tpu_custom_call.1} parent=27 // pred_region
          %s502 = ssub.s32 16, 16
          %503 = vsyncadd [#allocation9], %s502
          %s505 = sshll.u32 [#allocation8], 4
          %s506 = int_to_ptr.vmem [resolvable:$true] %s505
          %508 = dma.vmem_to_hbm [thread:$0]  %s506, 16, %s3, [#allocation9]
        $region48: #{tpu_custom_call.1} parent=27 // pred_fallthru
          _
        // Predicated region
        $region49: #{tpu_custom_call.1} parent=27 // pred_check
          %p509 = pneg %p131
        $region50: #{tpu_custom_call.1} parent=27 // pred_check_branch
          %511 = sbr.rel (%p509) target = $region52
        $region51: #{tpu_custom_call.1} parent=27 // pred_region
          %s513 = ssub.s32 16, 16
          %514 = vsyncadd [#allocation9], %s513
          %s516 = sshll.u32 [#allocation10], 4
          %s517 = int_to_ptr.vmem [resolvable:$true] %s516
          %519 = dma.vmem_to_hbm [thread:$0]  %s517, 16, %s4, [#allocation9]
        $region52: #{tpu_custom_call.1} parent=27 // pred_fallthru
          _
        // Predicated region
        $region53: #{tpu_custom_call.1} parent=27 // pred_check
          %p520 = pneg %p110
        $region54: #{tpu_custom_call.1} parent=27 // pred_check_branch
          %522 = sbr.rel (%p520) target = $region56
        $region55: #{tpu_custom_call.1} parent=27 // pred_region
          %523 = dma.done [#allocation9], 16
        $region56: #{tpu_custom_call.1} parent=27 // pred_fallthru
          _
        // Predicated region
        $region57: #{tpu_custom_call.1} parent=27 // pred_check
          %p524 = pneg %p131
        $region58: #{tpu_custom_call.1} parent=27 // pred_check_branch
          %526 = sbr.rel (%p524) target = $region60
        $region59: #{tpu_custom_call.1} parent=27 // pred_region
          %527 = dma.done [#allocation9], 16
        $region60: #{tpu_custom_call.1} parent=27 // pred_fallthru
          _
      $region28: #{tpu_custom_call.1} parent=5 // pred_fallthru
        _
      %p528 = scmp.le.s32.totalorder 2, %s19
      // Predicated region
      $region61: #{tpu_custom_call.1} parent=5 // pred_check
        %p529 = pneg %p528
      $region62: #{tpu_custom_call.1} parent=5 // pred_check_branch
        %531 = sbr.rel (%p529) target = $region64
      $region63: #{tpu_custom_call.1} parent=5 // pred_region
        %s532 = ssub.s32 %s19, 2
        // Predicated region
        $region65: #{tpu_custom_call.1} parent=63 // pred_check
          %p533 = pneg %p95
        $region66: #{tpu_custom_call.1} parent=63 // pred_check_branch
          %535 = sbr.rel (%p533) target = $region68
        $region67: #{tpu_custom_call.1} parent=63 // pred_region
          %s536 = sand.u32 %s80, 1
          %s537 = scalar_lea.sflag [#allocation4], %s536
          %s538 = sand.u32 %s80, 1
          %s539 = smul.addr %s538, 32
          %s540 = scalar_lea.vmem [#allocation7], %s539
          %541 = dma.done %s537, 512
        $region68: #{tpu_custom_call.1} parent=63 // pred_fallthru
          _
      $region64: #{tpu_custom_call.1} parent=5 // pred_fallthru
        _
    $region6: #{tpu_custom_call.1} parent=1 // loop_footer
      %s23 = sadd.s32 1, %s19
    $region7: #{tpu_custom_call.1} parent=1 // loop_footer_branch
      %18 = sbr.rel target = $region3
    $region8: #{tpu_custom_call.1} parent=1 // loop_exit
      _
    %542 = vsyncpa [#allocation3], 1
    %s543 = scalar_lea.sflag [#allocation3], 1
    %544 = vsyncpa %s543, 1
    %545 = vsyncpa [#allocation6], 1
    %546 = vsyncpa [#allocation4], 1
    %s547 = scalar_lea.sflag [#allocation4], 1
    %548 = vsyncpa %s547, 1
    %549 = vsyncpa [#allocation9], 1

</llo_original>
